<compile_context>
chip_gen: v7x
topology: tpu7x:2x2x1
jax: 0.10.0
libtpu: 0.0.40
codegen_flags: <defaults>
</compile_context>

<pallas_src>
import jax
import jax.numpy as jnp
from jax.experimental import pallas as pl
from jax.experimental.pallas import tpu as pltpu

POOL = 7  # nn.AvgPool2d(7, stride=1)


def res_head_kernel(x_ref, w_ref, b_ref, o_ref):
    """Global 7x7 avgpool (scale folded into w) -> fc (bf16 MXU) -> relu."""
    x = x_ref[...].astype(jnp.float32)             # (TM, HW, C) channels-last tile
    pooled = jnp.sum(x, axis=1)                    # (TM, C); f32 accumulation, XLU/VPU
    y = jnp.dot(pooled.astype(jnp.bfloat16), w_ref[...],
                preferred_element_type=jnp.float32)   # (TM, 512) on the MXU
    y = y + b_ref[...]                             # (1, 512) bias broadcast
    o_ref[...] = jnp.maximum(y, 0.0).astype(o_ref.dtype)


def res_forward(feats_nchw, fc_w, fc_b, *, tm=None):
    """feats_nchw: (N, C, H, W) backbone features, H == W == 7.
       fc_w:       (512, size) PyTorch Linear weight (size == C, pool output is 1x1).
       fc_b:       (512,) bias."""
    N, C, H, W = feats_nchw.shape
    out_dim, size = fc_w.shape
    # TODO(synk): only the H == W == 7 case (pool output 1x1) is implemented, which is
    # what the ResNet/VGG backbones feed this head; general OH/OW would need windowing.
    assert H == POOL and W == POOL, "expected a 7x7 backbone feature map"
    assert size == C * (H - POOL + 1) * (W - POOL + 1), "fc input dim mismatch"

    HW = H * W
    # Channels-last so C lands on the 128-lane axis (lane-dense pooling + matmul operand).
    x = jnp.transpose(feats_nchw, (0, 2, 3, 1)).reshape(N, HW, C)

    # Fold the 1/49 average into the weight (free at trace time); bf16 for the MXU.
    w = (fc_w.T.astype(jnp.float32) * (1.0 / HW)).astype(jnp.bfloat16)   # (C, 512)
    b = fc_b.astype(jnp.float32).reshape(1, out_dim)

    # Batch tile: largest tile whose double-buffered feature DMA stays well under the
    # scoped VMEM budget (v7x has only 64 MiB physical VMEM), capped at 256 rows.
    if tm is None:
        bytes_per_row = HW * C * x.dtype.itemsize
        tm = max(8, min(256, (12 * 1024 * 1024) // max(1, bytes_per_row)))
        if tm >= N:
            tm = N
        else:
            tm = max(8, (tm // 8) * 8)
    grid = (pl.cdiv(N, tm),)

    return pl.pallas_call(
        res_head_kernel,
        out_shape=jax.ShapeDtypeStruct((N, out_dim), jnp.float32),
        grid_spec=pltpu.PrefetchScalarGridSpec(
            num_scalar_prefetch=0,
            grid=grid,
            in_specs=[
                pl.BlockSpec((tm, HW, C), lambda i: (i, 0, 0)),   # feature tile (pipelined)
                pl.BlockSpec((C, out_dim), lambda i: (0, 0)),     # resident bf16 weight
                pl.BlockSpec((1, out_dim), lambda i: (0, 0)),     # resident bias row
            ],
            out_specs=pl.BlockSpec((tm, out_dim), lambda i: (i, 0)),  # lane-dense (tm, 512)
        ),
        compiler_params=pltpu.CompilerParams(
            dimension_semantics=("parallel",),        # shard batch across TCs on v7x
            vmem_limit_bytes=48 * 1024 * 1024,
        ),
    )(x, w, b)


if __name__ == "__main__":
    # Small shapes consistent with the module: the backbone's final feature map is
    # (N, C, 7, 7) so AvgPool2d(7, stride=1) -> (N, C, 1, 1) and fc input size == C.
    N, C, H, W = 4, 256, 7, 7
    SIZE, OUT = C, 512

    key = jax.random.PRNGKey(0)
    k_x, k_w, k_b = jax.random.split(key, 3)

    feats = jax.random.normal(k_x, (N, C, H, W), dtype=jnp.float32)

    # Deterministic Linear(size, 512) init (PyTorch-style uniform bound 1/sqrt(size)).
    bound = 1.0 / jnp.sqrt(jnp.float32(SIZE))
    fc_w = jax.random.uniform(k_w, (OUT, SIZE), jnp.float32, -bound, bound)  # torch layout (out, in)
    fc_b = jax.random.uniform(k_b, (OUT,), jnp.float32, -bound, bound)

    out = jax.block_until_ready(res_forward(feats, fc_w, fc_b))

    # Pure-JAX f32 reference of the module semantics (avgpool -> flatten -> fc -> relu).
    pooled_ref = jnp.mean(feats.reshape(N, C, H * W), axis=-1)               # 7x7 window == full map
    ref = jnp.maximum(pooled_ref @ fc_w.T + fc_b[None, :], 0.0)
    assert out.shape == (N, OUT)
    # Loose tolerance: kernel runs the fc matmul with bf16 operands (f32 accumulation).
    assert jnp.allclose(out, ref, atol=1e-2, rtol=1e-2), float(jnp.max(jnp.abs(out - ref)))

    print("KERNEL_OK")
</pallas_src>

<mosaic_0001>
module attributes {stable_mosaic.version = 11 : i64} {
  func.func @res_head_kernel(%arg0: i32, %arg1: memref<4x49x256xf32, #tpu.memory_space<vmem>>, %arg2: memref<256x512xbf16, #tpu.memory_space<vmem>>, %arg3: memref<1x512xf32, #tpu.memory_space<vmem>>, %arg4: memref<4x512xf32, #tpu.memory_space<vmem>>) attributes {dimension_semantics = [#tpu.dimension_semantics<parallel>], iteration_bounds = array<i64: 1>, scalar_prefetch = 0 : i64, scratch_operands = 0 : i64, tpu.core_type = #tpu.core_type<tc>, window_params = [{transform_indices = @transform_0, window_bounds = array<i64: 4, 49, 256>}, {pipeline_mode = #tpu.pipeline_mode<synchronous>, transform_indices = @transform_1, window_bounds = array<i64: 256, 512>}, {pipeline_mode = #tpu.pipeline_mode<synchronous>, transform_indices = @transform_2, window_bounds = array<i64: 1, 512>}, {transform_indices = @transform_3, window_bounds = array<i64: 4, 512>}]} {
    %c0 = arith.constant 0 : index
    %c0_0 = arith.constant 0 : index
    %c0_1 = arith.constant 0 : index
    %0 = vector.load %arg1[%c0, %c0_0, %c0_1] : memref<4x49x256xf32, #tpu.memory_space<vmem>>, vector<4x49x256xf32>
    %cst = arith.constant dense<0.000000e+00> : vector<4x256xf32>
    %1 = vector.multi_reduction <add>, %0, %cst [1] : vector<4x49x256xf32> to vector<4x256xf32>
    %2 = arith.truncf %1 : vector<4x256xf32> to vector<4x256xbf16>
    %c0_2 = arith.constant 0 : index
    %c0_3 = arith.constant 0 : index
    %3 = vector.load %arg2[%c0_2, %c0_3] : memref<256x512xbf16, #tpu.memory_space<vmem>>, vector<256x512xbf16>
    %cst_4 = arith.constant dense<0.000000e+00> : vector<4x512xf32>
    %4 = tpu.matmul %2, %3, %cst_4 {dimension_numbers = #tpu.dot_dimension_numbers<[1], [0], [0], [1], [0, 0, 1, 1], [], []>} : vector<4x256xbf16>, vector<256x512xbf16>, vector<4x512xf32> -> vector<4x512xf32>
    %c0_5 = arith.constant 0 : index
    %c0_6 = arith.constant 0 : index
    %5 = vector.load %arg3[%c0_5, %c0_6] : memref<1x512xf32, #tpu.memory_space<vmem>>, vector<1x512xf32>
    %6 = vector.broadcast %5 : vector<1x512xf32> to vector<4x512xf32>
    %7 = arith.addf %4, %6 : vector<4x512xf32>
    %cst_7 = arith.constant 0.000000e+00 : f32
    %8 = vector.broadcast %cst_7 : f32 to vector<4x512xf32>
    %9 = arith.maximumf %7, %8 : vector<4x512xf32>
    %c0_8 = arith.constant 0 : index
    %c0_9 = arith.constant 0 : index
    %10 = vector.load %arg4[%c0_8, %c0_9] : memref<4x512xf32, #tpu.memory_space<vmem>>, vector<4x512xf32>
    tpu.vector_store %arg4[%c0_8, %c0_9], %9 {strides = array<i32>} : memref<4x512xf32, #tpu.memory_space<vmem>>, vector<4x512xf32>,
    return
  }
  func.func @transform_0(%arg0: i32) -> (i32, i32, i32) {
    %c0_i32 = arith.constant 0 : i32
    %c0_i32_0 = arith.constant 0 : i32
    %c0_i32_1 = arith.constant 0 : i32
    return %arg0, %c0_i32, %c0_i32_0 : i32, i32, i32
  }
  func.func @transform_1(%arg0: i32) -> (i32, i32) {
    %c0_i32 = arith.constant 0 : i32
    %c0_i32_0 = arith.constant 0 : i32
    %c0_i32_1 = arith.constant 0 : i32
    return %c0_i32, %c0_i32_0 : i32, i32
  }
  func.func @transform_2(%arg0: i32) -> (i32, i32) {
    %c0_i32 = arith.constant 0 : i32
    %c0_i32_0 = arith.constant 0 : i32
    %c0_i32_1 = arith.constant 0 : i32
    return %c0_i32, %c0_i32_0 : i32, i32
  }
  func.func @transform_3(%arg0: i32) -> (i32, i32) {
    %c0_i32 = arith.constant 0 : i32
    %c0_i32_0 = arith.constant 0 : i32
    return %arg0, %c0_i32 : i32, i32
  }
}

</mosaic_0001>

<llo_original>
// kernel: tpu_custom_call.1
$region0: #{tpu_custom_call.1}
  #allocation0 [shape = 'u32[]', space=smem, size = 0x4, offset = 0x4, fixed_abs, tag = 'smem constant byte address 0x4 - core index']
  #allocation1 [shape = 'u32[144,128]{1,0:T(1,128)}', space=vmem, size = 0x12000, scoped, tag = 'internal scratch']
  %s0 = inlined_call_operand.vmem [shape: f32[4,49,256], index: 0, kind: input, shape index: {}]
  %s1 = inlined_call_operand.vmem [shape: bf16[256,512], index: 1, kind: input, shape index: {}]
  %s2 = inlined_call_operand.vmem [shape: f32[1,512], index: 2, kind: input, shape index: {}]
  %s3 = inlined_call_operand.hbm [shape: f32[4,512], index: 3, kind: output, shape index: {}]
  %s4 = sld [smem:[#allocation0]]
  $region22: #{tpu_custom_call.1} parent=0
    _
  %s6 = ssub.s32 1, %s4
  %s7 = scalar_select 0, %s6, %s4
  $region1: #{tpu_custom_call.1} parent=0
    #allocation2 [shape = 'u8[8192]{0}', space=vmem, size = 0x2000, scoped, tag = 'output window, operand 0, single buffered']
    #allocation3 [shape = 's32[1]{0}', space=sflag, size = 0x4, scoped, tag = 'scoped memory for tpu_custom_call.1']
    %8 = vsyncpa [#allocation3], 0
    // Predicated region
    $region2: #{tpu_custom_call.1} parent=1 // pred_check
      _
    $region3: #{tpu_custom_call.1} parent=1 // pred_check_branch
      %10 = sbr.rel (0) target = $region5
    $region4: #{tpu_custom_call.1} parent=1 // pred_region
      _
    $region5: #{tpu_custom_call.1} parent=1 // pred_fallthru
      _
    // Predicated region
    $region6: #{tpu_custom_call.1} parent=1 // pred_check
      _
    $region7: #{tpu_custom_call.1} parent=1 // pred_check_branch
      %12 = sbr.rel (0) target = $region9
    $region8: #{tpu_custom_call.1} parent=1 // pred_region
      _
    $region9: #{tpu_custom_call.1} parent=1 // pred_fallthru
      _
    // Predicated region
    $region10: #{tpu_custom_call.1} parent=1 // pred_check
      _
    $region11: #{tpu_custom_call.1} parent=1 // pred_check_branch
      %14 = sbr.rel (0) target = $region13
    $region12: #{tpu_custom_call.1} parent=1 // pred_region
      _
    $region13: #{tpu_custom_call.1} parent=1 // pred_fallthru
      _
    %v15 = vld [vmem:[%s0] sm:$0xff]
    %v16 = vld [vmem:[%s0 + $0x8] sm:$0xff]
    %v17 = vld [vmem:[%s0 + $0x10] sm:$0xff]
    %v18 = vld [vmem:[%s0 + $0x18] sm:$0xff]
    %v19 = vld [vmem:[%s0 + $0x20] sm:$0xff]
    %v20 = vld [vmem:[%s0 + $0x28] sm:$0xff]
    %v21 = vld [vmem:[%s0 + $0x30] sm:$0xff]
    %v22 = vld [vmem:[%s0 + $0x38] sm:$0xff]
    %v23 = vld [vmem:[%s0 + $0x40] sm:$0xff]
    %v24 = vld [vmem:[%s0 + $0x48] sm:$0xff]
    %v25 = vld [vmem:[%s0 + $0x50] sm:$0xff]
    %v26 = vld [vmem:[%s0 + $0x58] sm:$0xff]
    %v27 = vld [vmem:[%s0 + $0x60] sm:$0x1]
    %v28 = vld [vmem:[%s0 + $0x68] sm:$0x1]
    %v29 = vld [vmem:[%s0 + $0x70] sm:$0xff]
    %v30 = vld [vmem:[%s0 + $0x78] sm:$0xff]
    %v31 = vld [vmem:[%s0 + $0x80] sm:$0xff]
    %v32 = vld [vmem:[%s0 + $0x88] sm:$0xff]
    %v33 = vld [vmem:[%s0 + $0x90] sm:$0xff]
    %v34 = vld [vmem:[%s0 + $0x98] sm:$0xff]
    %v35 = vld [vmem:[%s0 + $0xa0] sm:$0xff]
    %v36 = vld [vmem:[%s0 + $0xa8] sm:$0xff]
    %v37 = vld [vmem:[%s0 + $0xb0] sm:$0xff]
    %v38 = vld [vmem:[%s0 + $0xb8] sm:$0xff]
    %v39 = vld [vmem:[%s0 + $0xc0] sm:$0xff]
    %v40 = vld [vmem:[%s0 + $0xc8] sm:$0xff]
    %v41 = vld [vmem:[%s0 + $0xd0] sm:$0x1]
    %v42 = vld [vmem:[%s0 + $0xd8] sm:$0x1]
    %v43 = vld [vmem:[%s0 + $0xe0] sm:$0xff]
    %v44 = vld [vmem:[%s0 + $0xe8] sm:$0xff]
    %v45 = vld [vmem:[%s0 + $0xf0] sm:$0xff]
    %v46 = vld [vmem:[%s0 + $0xf8] sm:$0xff]
    %v47 = vld [vmem:[%s0 + $0x100] sm:$0xff]
    %v48 = vld [vmem:[%s0 + $0x108] sm:$0xff]
    %v49 = vld [vmem:[%s0 + $0x110] sm:$0xff]
    %v50 = vld [vmem:[%s0 + $0x118] sm:$0xff]
    %v51 = vld [vmem:[%s0 + $0x120] sm:$0xff]
    %v52 = vld [vmem:[%s0 + $0x128] sm:$0xff]
    %v53 = vld [vmem:[%s0 + $0x130] sm:$0xff]
    %v54 = vld [vmem:[%s0 + $0x138] sm:$0xff]
    %v55 = vld [vmem:[%s0 + $0x140] sm:$0x1]
    %v56 = vld [vmem:[%s0 + $0x148] sm:$0x1]
    %v57 = vld [vmem:[%s0 + $0x150] sm:$0xff]
    %v58 = vld [vmem:[%s0 + $0x158] sm:$0xff]
    %v59 = vld [vmem:[%s0 + $0x160] sm:$0xff]
    %v60 = vld [vmem:[%s0 + $0x168] sm:$0xff]
    %v61 = vld [vmem:[%s0 + $0x170] sm:$0xff]
    %v62 = vld [vmem:[%s0 + $0x178] sm:$0xff]
    %v63 = vld [vmem:[%s0 + $0x180] sm:$0xff]
    %v64 = vld [vmem:[%s0 + $0x188] sm:$0xff]
    %v65 = vld [vmem:[%s0 + $0x190] sm:$0xff]
    %v66 = vld [vmem:[%s0 + $0x198] sm:$0xff]
    %v67 = vld [vmem:[%s0 + $0x1a0] sm:$0xff]
    %v68 = vld [vmem:[%s0 + $0x1a8] sm:$0xff]
    %v69 = vld [vmem:[%s0 + $0x1b0] sm:$0x1]
    %v70 = vld [vmem:[%s0 + $0x1b8] sm:$0x1]
    %v71 = vadd.f32 %v15, %v17
    %v72 = vadd.f32 %v71, %v19
    %v73 = vadd.f32 %v72, %v21
    %v74 = vadd.f32 %v73, %v23
    %v75 = vadd.f32 %v74, %v25
    %vm76 = vcmask 1040384
    %v77 = vsel %vm76, %v27, 0.0
    %v78 = vadd.f32 %v75, %v77
    %v79 = vrot.slane %v78, 4
    %v80 = vadd.f32 %v78, %v79
    %v81 = vrot.slane %v80, 2
    %v82 = vadd.f32 %v80, %v81
    %v83 = vrot.slane %v82, 1
    %v84 = vadd.f32 %v82, %v83
    %v85 = vadd.f32 %v16, %v18
    %v86 = vadd.f32 %v85, %v20
    %v87 = vadd.f32 %v86, %v22
    %v88 = vadd.f32 %v87, %v24
    %v89 = vadd.f32 %v88, %v26
    %v90 = vsel %vm76, %v28, 0.0
    %v91 = vadd.f32 %v89, %v90
    %v92 = vrot.slane %v91, 4
    %v93 = vadd.f32 %v91, %v92
    %v94 = vrot.slane %v93, 2
    %v95 = vadd.f32 %v93, %v94
    %v96 = vrot.slane %v95, 1
    %v97 = vadd.f32 %v95, %v96
    %v98 = vadd.f32 %v29, %v31
    %v99 = vadd.f32 %v98, %v33
    %v100 = vadd.f32 %v99, %v35
    %v101 = vadd.f32 %v100, %v37
    %v102 = vadd.f32 %v101, %v39
    %v103 = vsel %vm76, %v41, 0.0
    %v104 = vadd.f32 %v102, %v103
    %v105 = vrot.slane %v104, 4
    %v106 = vadd.f32 %v104, %v105
    %v107 = vrot.slane %v106, 2
    %v108 = vadd.f32 %v106, %v107
    %v109 = vrot.slane %v108, 1
    %v110 = vadd.f32 %v108, %v109
    %v111 = vadd.f32 %v30, %v32
    %v112 = vadd.f32 %v111, %v34
    %v113 = vadd.f32 %v112, %v36
    %v114 = vadd.f32 %v113, %v38
    %v115 = vadd.f32 %v114, %v40
    %v116 = vsel %vm76, %v42, 0.0
    %v117 = vadd.f32 %v115, %v116
    %v118 = vrot.slane %v117, 4
    %v119 = vadd.f32 %v117, %v118
    %v120 = vrot.slane %v119, 2
    %v121 = vadd.f32 %v119, %v120
    %v122 = vrot.slane %v121, 1
    %v123 = vadd.f32 %v121, %v122
    %v124 = vadd.f32 %v43, %v45
    %v125 = vadd.f32 %v124, %v47
    %v126 = vadd.f32 %v125, %v49
    %v127 = vadd.f32 %v126, %v51
    %v128 = vadd.f32 %v127, %v53
    %v129 = vsel %vm76, %v55, 0.0
    %v130 = vadd.f32 %v128, %v129
    %v131 = vrot.slane %v130, 4
    %v132 = vadd.f32 %v130, %v131
    %v133 = vrot.slane %v132, 2
    %v134 = vadd.f32 %v132, %v133
    %v135 = vrot.slane %v134, 1
    %v136 = vadd.f32 %v134, %v135
    %v137 = vadd.f32 %v44, %v46
    %v138 = vadd.f32 %v137, %v48
    %v139 = vadd.f32 %v138, %v50
    %v140 = vadd.f32 %v139, %v52
    %v141 = vadd.f32 %v140, %v54
    %v142 = vsel %vm76, %v56, 0.0
    %v143 = vadd.f32 %v141, %v142
    %v144 = vrot.slane %v143, 4
    %v145 = vadd.f32 %v143, %v144
    %v146 = vrot.slane %v145, 2
    %v147 = vadd.f32 %v145, %v146
    %v148 = vrot.slane %v147, 1
    %v149 = vadd.f32 %v147, %v148
    %v150 = vadd.f32 %v57, %v59
    %v151 = vadd.f32 %v150, %v61
    %v152 = vadd.f32 %v151, %v63
    %v153 = vadd.f32 %v152, %v65
    %v154 = vadd.f32 %v153, %v67
    %v155 = vsel %vm76, %v69, 0.0
    %v156 = vadd.f32 %v154, %v155
    %v157 = vrot.slane %v156, 4
    %v158 = vadd.f32 %v156, %v157
    %v159 = vrot.slane %v158, 2
    %v160 = vadd.f32 %v158, %v159
    %v161 = vrot.slane %v160, 1
    %v162 = vadd.f32 %v160, %v161
    %v163 = vadd.f32 %v58, %v60
    %v164 = vadd.f32 %v163, %v62
    %v165 = vadd.f32 %v164, %v64
    %v166 = vadd.f32 %v165, %v66
    %v167 = vadd.f32 %v166, %v68
    %v168 = vsel %vm76, %v70, 0.0
    %v169 = vadd.f32 %v167, %v168
    %v170 = vrot.slane %v169, 4
    %v171 = vadd.f32 %v169, %v170
    %v172 = vrot.slane %v171, 2
    %v173 = vadd.f32 %v171, %v172
    %v174 = vrot.slane %v173, 1
    %v175 = vadd.f32 %v173, %v174
    %v176 = vpack.c.bf16 %v84, %v84
    %v177 = vpack.c.bf16 %v97, %v97
    %v178 = vpack.c.bf16 %v110, %v110
    %v179 = vpack.c.bf16 %v123, %v123
    %v180 = vpack.c.bf16 %v136, %v136
    %v181 = vpack.c.bf16 %v149, %v149
    %v182 = vpack.c.bf16 %v162, %v162
    %v183 = vpack.c.bf16 %v175, %v175
    %v184 = vld [vmem:[%s1] sm:$0xff]
    %v185 = vld [vmem:[%s1 + $0x8] sm:$0xff]
    %v186 = vld [vmem:[%s1 + $0x10] sm:$0xff]
    %v187 = vld [vmem:[%s1 + $0x18] sm:$0xff]
    %v188 = vld [vmem:[%s1 + $0x20] sm:$0xff]
    %v189 = vld [vmem:[%s1 + $0x28] sm:$0xff]
    %v190 = vld [vmem:[%s1 + $0x30] sm:$0xff]
    %v191 = vld [vmem:[%s1 + $0x38] sm:$0xff]
    %v192 = vld [vmem:[%s1 + $0x40] sm:$0xff]
    %v193 = vld [vmem:[%s1 + $0x48] sm:$0xff]
    %v194 = vld [vmem:[%s1 + $0x50] sm:$0xff]
    %v195 = vld [vmem:[%s1 + $0x58] sm:$0xff]
    %v196 = vld [vmem:[%s1 + $0x60] sm:$0xff]
    %v197 = vld [vmem:[%s1 + $0x68] sm:$0xff]
    %v198 = vld [vmem:[%s1 + $0x70] sm:$0xff]
    %v199 = vld [vmem:[%s1 + $0x78] sm:$0xff]
    %v200 = vld [vmem:[%s1 + $0x80] sm:$0xff]
    %v201 = vld [vmem:[%s1 + $0x88] sm:$0xff]
    %v202 = vld [vmem:[%s1 + $0x90] sm:$0xff]
    %v203 = vld [vmem:[%s1 + $0x98] sm:$0xff]
    %v204 = vld [vmem:[%s1 + $0xa0] sm:$0xff]
    %v205 = vld [vmem:[%s1 + $0xa8] sm:$0xff]
    %v206 = vld [vmem:[%s1 + $0xb0] sm:$0xff]
    %v207 = vld [vmem:[%s1 + $0xb8] sm:$0xff]
    %v208 = vld [vmem:[%s1 + $0xc0] sm:$0xff]
    %v209 = vld [vmem:[%s1 + $0xc8] sm:$0xff]
    %v210 = vld [vmem:[%s1 + $0xd0] sm:$0xff]
    %v211 = vld [vmem:[%s1 + $0xd8] sm:$0xff]
    %v212 = vld [vmem:[%s1 + $0xe0] sm:$0xff]
    %v213 = vld [vmem:[%s1 + $0xe8] sm:$0xff]
    %v214 = vld [vmem:[%s1 + $0xf0] sm:$0xff]
    %v215 = vld [vmem:[%s1 + $0xf8] sm:$0xff]
    %v216 = vld [vmem:[%s1 + $0x100] sm:$0xff]
    %v217 = vld [vmem:[%s1 + $0x108] sm:$0xff]
    %v218 = vld [vmem:[%s1 + $0x110] sm:$0xff]
    %v219 = vld [vmem:[%s1 + $0x118] sm:$0xff]
    %v220 = vld [vmem:[%s1 + $0x120] sm:$0xff]
    %v221 = vld [vmem:[%s1 + $0x128] sm:$0xff]
    %v222 = vld [vmem:[%s1 + $0x130] sm:$0xff]
    %v223 = vld [vmem:[%s1 + $0x138] sm:$0xff]
    %v224 = vld [vmem:[%s1 + $0x140] sm:$0xff]
    %v225 = vld [vmem:[%s1 + $0x148] sm:$0xff]
    %v226 = vld [vmem:[%s1 + $0x150] sm:$0xff]
    %v227 = vld [vmem:[%s1 + $0x158] sm:$0xff]
    %v228 = vld [vmem:[%s1 + $0x160] sm:$0xff]
    %v229 = vld [vmem:[%s1 + $0x168] sm:$0xff]
    %v230 = vld [vmem:[%s1 + $0x170] sm:$0xff]
    %v231 = vld [vmem:[%s1 + $0x178] sm:$0xff]
    %v232 = vld [vmem:[%s1 + $0x180] sm:$0xff]
    %v233 = vld [vmem:[%s1 + $0x188] sm:$0xff]
    %v234 = vld [vmem:[%s1 + $0x190] sm:$0xff]
    %v235 = vld [vmem:[%s1 + $0x198] sm:$0xff]
    %v236 = vld [vmem:[%s1 + $0x1a0] sm:$0xff]
    %v237 = vld [vmem:[%s1 + $0x1a8] sm:$0xff]
    %v238 = vld [vmem:[%s1 + $0x1b0] sm:$0xff]
    %v239 = vld [vmem:[%s1 + $0x1b8] sm:$0xff]
    %v240 = vld [vmem:[%s1 + $0x1c0] sm:$0xff]
    %v241 = vld [vmem:[%s1 + $0x1c8] sm:$0xff]
    %v242 = vld [vmem:[%s1 + $0x1d0] sm:$0xff]
    %v243 = vld [vmem:[%s1 + $0x1d8] sm:$0xff]
    %v244 = vld [vmem:[%s1 + $0x1e0] sm:$0xff]
    %v245 = vld [vmem:[%s1 + $0x1e8] sm:$0xff]
    %v246 = vld [vmem:[%s1 + $0x1f0] sm:$0xff]
    %v247 = vld [vmem:[%s1 + $0x1f8] sm:$0xff]
    %v248 = vld [vmem:[%s2] sm:$0xf]
    %v250 = vlaneseq
    %v251 = vshrl.u32 %v250, 7
    %v252 = vsub.s32 0, %v251
    %v253 = vrot.slane %v248, %v252
    %v254 = vlaneseq
    %v255 = vshrl.u32 %v254, 7
    %v256 = vsub.s32 1, %v255
    %v257 = vrot.slane %v248, %v256
    %v258 = vlaneseq
    %v259 = vshrl.u32 %v258, 7
    %v260 = vsub.s32 2, %v259
    %v261 = vrot.slane %v248, %v260
    %v262 = vlaneseq
    %v263 = vshrl.u32 %v262, 7
    %v264 = vsub.s32 3, %v263
    %v265 = vrot.slane %v248, %v264
    %v278 = vunpack.c.l.b16 %v176
    %v279 = vunpack.c.l.b16 %v177
    %v280 = vunpack.c.l.b16 %v178
    %v281 = vunpack.c.l.b16 %v179
    %v282 = vunpack.c.l.b16 %v180
    %v283 = vunpack.c.l.b16 %v181
    %v284 = vunpack.c.l.b16 %v182
    %v285 = vunpack.c.l.b16 %v183
    %vm286 = vcmask 1041409
    %v287 = vsel %vm286, %v280, %v278
    %vm288 = vcmask 1042434
    %v289 = vsel %vm288, %v282, %v287
    %vm290 = vcmask 1043459
    %v291 = vsel %vm290, %v284, %v289
    %v292 = vsel %vm286, %v281, %v279
    %v293 = vsel %vm288, %v283, %v292
    %v294 = vsel %vm290, %v285, %v293
    %v295 = vpack.c.b16 %v291, %v291
    %v296 = vpack.c.b16 %v294, %v294
    %v363 = vunpack.c.l.b16 %v184
    %v364 = vunpack.c.h.b16 %v184
    %v365 = vunpack.c.l.b16 %v185
    %v366 = vunpack.c.h.b16 %v185
    %v367 = vunpack.c.l.b16 %v186
    %v368 = vunpack.c.h.b16 %v186
    %v369 = vunpack.c.l.b16 %v187
    %v370 = vunpack.c.h.b16 %v187
    %v371 = vunpack.c.l.b16 %v188
    %v372 = vunpack.c.h.b16 %v188
    %v373 = vunpack.c.l.b16 %v189
    %v374 = vunpack.c.h.b16 %v189
    %v375 = vunpack.c.l.b16 %v190
    %v376 = vunpack.c.h.b16 %v190
    %v377 = vunpack.c.l.b16 %v191
    %v378 = vunpack.c.h.b16 %v191
    %v379 = vunpack.c.l.b16 %v192
    %v380 = vunpack.c.h.b16 %v192
    %v381 = vunpack.c.l.b16 %v193
    %v382 = vunpack.c.h.b16 %v193
    %v383 = vunpack.c.l.b16 %v194
    %v384 = vunpack.c.h.b16 %v194
    %v385 = vunpack.c.l.b16 %v195
    %v386 = vunpack.c.h.b16 %v195
    %v387 = vunpack.c.l.b16 %v196
    %v388 = vunpack.c.h.b16 %v196
    %v389 = vunpack.c.l.b16 %v197
    %v390 = vunpack.c.h.b16 %v197
    %v391 = vunpack.c.l.b16 %v198
    %v392 = vunpack.c.h.b16 %v198
    %v393 = vunpack.c.l.b16 %v199
    %v394 = vunpack.c.h.b16 %v199
    %v395 = vunpack.c.l.b16 %v200
    %v396 = vunpack.c.h.b16 %v200
    %v397 = vunpack.c.l.b16 %v201
    %v398 = vunpack.c.h.b16 %v201
    %v399 = vunpack.c.l.b16 %v202
    %v400 = vunpack.c.h.b16 %v202
    %v401 = vunpack.c.l.b16 %v203
    %v402 = vunpack.c.h.b16 %v203
    %v403 = vunpack.c.l.b16 %v204
    %v404 = vunpack.c.h.b16 %v204
    %v405 = vunpack.c.l.b16 %v205
    %v406 = vunpack.c.h.b16 %v205
    %v407 = vunpack.c.l.b16 %v206
    %v408 = vunpack.c.h.b16 %v206
    %v409 = vunpack.c.l.b16 %v207
    %v410 = vunpack.c.h.b16 %v207
    %v411 = vunpack.c.l.b16 %v208
    %v412 = vunpack.c.h.b16 %v208
    %v413 = vunpack.c.l.b16 %v209
    %v414 = vunpack.c.h.b16 %v209
    %v415 = vunpack.c.l.b16 %v210
    %v416 = vunpack.c.h.b16 %v210
    %v417 = vunpack.c.l.b16 %v211
    %v418 = vunpack.c.h.b16 %v211
    %v419 = vunpack.c.l.b16 %v212
    %v420 = vunpack.c.h.b16 %v212
    %v421 = vunpack.c.l.b16 %v213
    %v422 = vunpack.c.h.b16 %v213
    %v423 = vunpack.c.l.b16 %v214
    %v424 = vunpack.c.h.b16 %v214
    %v425 = vunpack.c.l.b16 %v215
    %v426 = vunpack.c.h.b16 %v215
    %v427 = vunpack.c.l.b16 %v216
    %v428 = vunpack.c.h.b16 %v216
    %v429 = vunpack.c.l.b16 %v217
    %v430 = vunpack.c.h.b16 %v217
    %v431 = vunpack.c.l.b16 %v218
    %v432 = vunpack.c.h.b16 %v218
    %v433 = vunpack.c.l.b16 %v219
    %v434 = vunpack.c.h.b16 %v219
    %v435 = vunpack.c.l.b16 %v220
    %v436 = vunpack.c.h.b16 %v220
    %v437 = vunpack.c.l.b16 %v221
    %v438 = vunpack.c.h.b16 %v221
    %v439 = vunpack.c.l.b16 %v222
    %v440 = vunpack.c.h.b16 %v222
    %v441 = vunpack.c.l.b16 %v223
    %v442 = vunpack.c.h.b16 %v223
    %v443 = vunpack.c.l.b16 %v224
    %v444 = vunpack.c.h.b16 %v224
    %v445 = vunpack.c.l.b16 %v225
    %v446 = vunpack.c.h.b16 %v225
    %v447 = vunpack.c.l.b16 %v226
    %v448 = vunpack.c.h.b16 %v226
    %v449 = vunpack.c.l.b16 %v227
    %v450 = vunpack.c.h.b16 %v227
    %v451 = vunpack.c.l.b16 %v228
    %v452 = vunpack.c.h.b16 %v228
    %v453 = vunpack.c.l.b16 %v229
    %v454 = vunpack.c.h.b16 %v229
    %v455 = vunpack.c.l.b16 %v230
    %v456 = vunpack.c.h.b16 %v230
    %v457 = vunpack.c.l.b16 %v231
    %v458 = vunpack.c.h.b16 %v231
    %v459 = vunpack.c.l.b16 %v232
    %v460 = vunpack.c.h.b16 %v232
    %v461 = vunpack.c.l.b16 %v233
    %v462 = vunpack.c.h.b16 %v233
    %v463 = vunpack.c.l.b16 %v234
    %v464 = vunpack.c.h.b16 %v234
    %v465 = vunpack.c.l.b16 %v235
    %v466 = vunpack.c.h.b16 %v235
    %v467 = vunpack.c.l.b16 %v236
    %v468 = vunpack.c.h.b16 %v236
    %v469 = vunpack.c.l.b16 %v237
    %v470 = vunpack.c.h.b16 %v237
    %v471 = vunpack.c.l.b16 %v238
    %v472 = vunpack.c.h.b16 %v238
    %v473 = vunpack.c.l.b16 %v239
    %v474 = vunpack.c.h.b16 %v239
    %v475 = vunpack.c.l.b16 %v240
    %v476 = vunpack.c.h.b16 %v240
    %v477 = vunpack.c.l.b16 %v241
    %v478 = vunpack.c.h.b16 %v241
    %v479 = vunpack.c.l.b16 %v242
    %v480 = vunpack.c.h.b16 %v242
    %v481 = vunpack.c.l.b16 %v243
    %v482 = vunpack.c.h.b16 %v243
    %v483 = vunpack.c.l.b16 %v244
    %v484 = vunpack.c.h.b16 %v244
    %v485 = vunpack.c.l.b16 %v245
    %v486 = vunpack.c.h.b16 %v245
    %v487 = vunpack.c.l.b16 %v246
    %v488 = vunpack.c.h.b16 %v246
    %v489 = vunpack.c.l.b16 %v247
    %v490 = vunpack.c.h.b16 %v247
    %v491 = vpack.c.b16 %v367, %v363
    %v492 = vpack.c.b16 %v368, %v364
    %v493 = vpack.c.b16 %v369, %v365
    %v494 = vpack.c.b16 %v370, %v366
    %v495 = vpack.c.b16 %v375, %v371
    %v496 = vpack.c.b16 %v376, %v372
    %v497 = vpack.c.b16 %v377, %v373
    %v498 = vpack.c.b16 %v378, %v374
    %v499 = vpack.c.b16 %v383, %v379
    %v500 = vpack.c.b16 %v384, %v380
    %v501 = vpack.c.b16 %v385, %v381
    %v502 = vpack.c.b16 %v386, %v382
    %v503 = vpack.c.b16 %v391, %v387
    %v504 = vpack.c.b16 %v392, %v388
    %v505 = vpack.c.b16 %v393, %v389
    %v506 = vpack.c.b16 %v394, %v390
    %v507 = vpack.c.b16 %v399, %v395
    %v508 = vpack.c.b16 %v400, %v396
    %v509 = vpack.c.b16 %v401, %v397
    %v510 = vpack.c.b16 %v402, %v398
    %v511 = vpack.c.b16 %v407, %v403
    %v512 = vpack.c.b16 %v408, %v404
    %v513 = vpack.c.b16 %v409, %v405
    %v514 = vpack.c.b16 %v410, %v406
    %v515 = vpack.c.b16 %v415, %v411
    %v516 = vpack.c.b16 %v416, %v412
    %v517 = vpack.c.b16 %v417, %v413
    %v518 = vpack.c.b16 %v418, %v414
    %v519 = vpack.c.b16 %v423, %v419
    %v520 = vpack.c.b16 %v424, %v420
    %v521 = vpack.c.b16 %v425, %v421
    %v522 = vpack.c.b16 %v426, %v422
    %v523 = vpack.c.b16 %v431, %v427
    %v524 = vpack.c.b16 %v432, %v428
    %v525 = vpack.c.b16 %v433, %v429
    %v526 = vpack.c.b16 %v434, %v430
    %v527 = vpack.c.b16 %v439, %v435
    %v528 = vpack.c.b16 %v440, %v436
    %v529 = vpack.c.b16 %v441, %v437
    %v530 = vpack.c.b16 %v442, %v438
    %v531 = vpack.c.b16 %v447, %v443
    %v532 = vpack.c.b16 %v448, %v444
    %v533 = vpack.c.b16 %v449, %v445
    %v534 = vpack.c.b16 %v450, %v446
    %v535 = vpack.c.b16 %v455, %v451
    %v536 = vpack.c.b16 %v456, %v452
    %v537 = vpack.c.b16 %v457, %v453
    %v538 = vpack.c.b16 %v458, %v454
    %v539 = vpack.c.b16 %v463, %v459
    %v540 = vpack.c.b16 %v464, %v460
    %v541 = vpack.c.b16 %v465, %v461
    %v542 = vpack.c.b16 %v466, %v462
    %v543 = vpack.c.b16 %v471, %v467
    %v544 = vpack.c.b16 %v472, %v468
    %v545 = vpack.c.b16 %v473, %v469
    %v546 = vpack.c.b16 %v474, %v470
    %v547 = vpack.c.b16 %v479, %v475
    %v548 = vpack.c.b16 %v480, %v476
    %v549 = vpack.c.b16 %v481, %v477
    %v550 = vpack.c.b16 %v482, %v478
    %v551 = vpack.c.b16 %v487, %v483
    %v552 = vpack.c.b16 %v488, %v484
    %v553 = vpack.c.b16 %v489, %v485
    %v554 = vpack.c.b16 %v490, %v486
    %619 = vmatprep.subr.bf16.mxu0 %v492
    %620 = vmatpush1.bf16.msra.mxu0 %v491
    %621 = vmatprep.subr.bf16.mxu0 %v496
    %622 = vmatpush1.bf16.msra.mxu0 %v495
    %623 = vmatprep.subr.bf16.mxu0 %v500
    %624 = vmatpush1.bf16.msra.mxu0 %v499
    %625 = vmatprep.subr.bf16.mxu0 %v504
    %626 = vmatpush1.bf16.msra.mxu0 %v503
    %627 = vmatprep.subr.bf16.mxu0 %v508
    %628 = vmatpush1.bf16.msra.mxu0 %v507
    %629 = vmatprep.subr.bf16.mxu0 %v512
    %630 = vmatpush1.bf16.msra.mxu0 %v511
    %631 = vmatprep.subr.bf16.mxu0 %v516
    %632 = vmatpush1.bf16.msra.mxu0 %v515
    %633 = vmatprep.subr.bf16.mxu0 %v520
    %634 = vmatpush1.bf16.msra.mxu0 %v519
    %635 = vmatprep.subr.bf16.mxu0 %v524
    %636 = vmatpush1.bf16.msra.mxu0 %v523
    %637 = vmatprep.subr.bf16.mxu0 %v528
    %638 = vmatpush1.bf16.msra.mxu0 %v527
    %639 = vmatprep.subr.bf16.mxu0 %v532
    %640 = vmatpush1.bf16.msra.mxu0 %v531
    %641 = vmatprep.subr.bf16.mxu0 %v536
    %642 = vmatpush1.bf16.msra.mxu0 %v535
    %643 = vmatprep.subr.bf16.mxu0 %v540
    %644 = vmatpush1.bf16.msra.mxu0 %v539
    %645 = vmatprep.subr.bf16.mxu0 %v544
    %646 = vmatpush1.bf16.msra.mxu0 %v543
    %647 = vmatprep.subr.bf16.mxu0 %v548
    %648 = vmatpush1.bf16.msra.mxu0 %v547
    %649 = vmatprep.subr.bf16.mxu0 %v552
    %650 = vmatpush1.bf16.msra.mxu0 %v551
    %651 = vmatprep.mubr.bf16.mxu0 %v296
    %652 = vmatmul.mubr.bf16.gmra.mrb[0].mxu0 %v295
    %v653 = vpop.f32.mrb[0].mxu0
    %v654 = vadd.f32 %v253, %v653
    %v655 = vpop.f32.mrb[0].mxu0
    %v656 = vadd.f32 %v257, %v655
    %v657 = vpop.f32.mrb[0].mxu0
    %v658 = vpop.f32.mrb[0].mxu0
    %659 = vdwg.mxu0
    %660 = vmatprep.subr.bf16.mxu0 %v494
    %661 = vmatpush1.bf16.msra.mxu0 %v493
    %662 = vmatprep.subr.bf16.mxu0 %v498
    %663 = vmatpush1.bf16.msra.mxu0 %v497
    %664 = vmatprep.subr.bf16.mxu0 %v502
    %665 = vmatpush1.bf16.msra.mxu0 %v501
    %666 = vmatprep.subr.bf16.mxu0 %v506
    %667 = vmatpush1.bf16.msra.mxu0 %v505
    %668 = vmatprep.subr.bf16.mxu0 %v510
    %669 = vmatpush1.bf16.msra.mxu0 %v509
    %670 = vmatprep.subr.bf16.mxu0 %v514
    %671 = vmatpush1.bf16.msra.mxu0 %v513
    %672 = vmatprep.subr.bf16.mxu0 %v518
    %673 = vmatpush1.bf16.msra.mxu0 %v517
    %674 = vmatprep.subr.bf16.mxu0 %v522
    %675 = vmatpush1.bf16.msra.mxu0 %v521
    %676 = vmatprep.subr.bf16.mxu0 %v526
    %677 = vmatpush1.bf16.msra.mxu0 %v525
    %678 = vmatprep.subr.bf16.mxu0 %v530
    %679 = vmatpush1.bf16.msra.mxu0 %v529
    %680 = vmatprep.subr.bf16.mxu0 %v534
    %681 = vmatpush1.bf16.msra.mxu0 %v533
    %682 = vmatprep.subr.bf16.mxu0 %v538
    %683 = vmatpush1.bf16.msra.mxu0 %v537
    %684 = vmatprep.subr.bf16.mxu0 %v542
    %685 = vmatpush1.bf16.msra.mxu0 %v541
    %686 = vmatprep.subr.bf16.mxu0 %v546
    %687 = vmatpush1.bf16.msra.mxu0 %v545
    %688 = vmatprep.subr.bf16.mxu0 %v550
    %689 = vmatpush1.bf16.msra.mxu0 %v549
    %690 = vmatprep.subr.bf16.mxu0 %v554
    %691 = vmatpush1.bf16.msra.mxu0 %v553
    %692 = vmatprep.mubr.bf16.mxu0 %v296
    %693 = vmatmul.mubr.bf16.gmra.mrb[0].mxu0 %v295
    %v694 = vpop.f32.mrb[0].mxu0
    %v695 = vadd.f32 %v261, %v694
    %v696 = vpop.f32.mrb[0].mxu0
    %v697 = vadd.f32 %v265, %v696
    %v698 = vpop.f32.mrb[0].mxu0
    %v699 = vpop.f32.mrb[0].mxu0
    %700 = vdwg.mxu0
    %v701 = vmax.f32 %v654, 0.0
    %v702 = vmax.f32 %v656, 0.0
    %v703 = vmax.f32 %v695, 0.0
    %v704 = vmax.f32 %v697, 0.0
    %v709 = vcombine.low %v701, %v702
    %v710 = vcombine.low %v703, %v704
    %713 = vst [vmem:[#allocation2] sm:$0xff] %v709
    %714 = vst [vmem:[#allocation2 + $0x8] sm:$0xff] %v710
    // Predicated region
    $region14: #{tpu_custom_call.1} parent=1 // pred_check
      _
    $region15: #{tpu_custom_call.1} parent=1 // pred_check_branch
      %716 = sbr.rel (0) target = $region17
    $region16: #{tpu_custom_call.1} parent=1 // pred_region
      %s718 = ssub.s32 256, 256
      %719 = vsyncadd [#allocation3], %s718
      %s721 = sshll.u32 [#allocation2], 4
      %s722 = int_to_ptr.vmem [resolvable:$true] %s721
      %724 = dma.vmem_to_hbm [thread:$0]  %s722, 256, %s3, [#allocation3]
    $region17: #{tpu_custom_call.1} parent=1 // pred_fallthru
      _
    // Predicated region
    $region18: #{tpu_custom_call.1} parent=1 // pred_check
      _
    $region19: #{tpu_custom_call.1} parent=1 // pred_check_branch
      %726 = sbr.rel (0) target = $region21
    $region20: #{tpu_custom_call.1} parent=1 // pred_region
      %727 = dma.done [#allocation3], 256
    $region21: #{tpu_custom_call.1} parent=1 // pred_fallthru
      _
    %728 = vsyncpa [#allocation3], 1

</llo_original>
